<compile_context>
chip_gen: v6e
topology: v6e:2x2x1
jax: 0.10.0
libtpu: 0.0.40
codegen_flags: <defaults>
</compile_context>

<pallas_src>
import jax
import jax.numpy as jnp
from jax.experimental import pallas as pl
from jax.experimental.pallas import tpu as pltpu


def meta_scaling_kernel(x_ref, w1_ref, b1_ref, w2_ref, b2_ref, out_ref):
    """Fused MLP on one transposed batch tile.

    x_ref:   (3E, Bt)  concatenated [year; genres; title]^T tile
    w1_ref:  (H, 3E)   first Linear weight, PyTorch (out, in) layout
    b1_ref:  (H, 1)
    w2_ref:  (E, H)    second Linear weight, PyTorch (out, in) layout
    b2_ref:  (E, 1)
    out_ref: (E, Bt)   scaling_emb^T tile
    """
    # Single K=3E matmul; batch (Bt) is the lane-dense N dimension.
    h = jnp.dot(w1_ref[...], x_ref[...], preferred_element_type=jnp.float32)
    h = jnp.maximum(h + b1_ref[...], 0.0)                # (H, Bt), bias bcast over lanes
    h = h.astype(x_ref.dtype)                            # keep MXU in input dtype (bf16 ok)
    out = jnp.dot(w2_ref[...], h, preferred_element_type=jnp.float32)
    out_ref[...] = (out + b2_ref[...]).astype(out_ref.dtype)


def _pick_block_b(B):
    """Lane-aligned batch tile; prefer >= 2 grid steps (pipelining, 2 TCs on v7x)."""
    if B % 128 != 0:
        return B  # must equal the full dim when not 128-aligned
    for cand in (2048, 1024, 512, 256, 128):
        if B % cand == 0 and B // cand >= 2:
            return cand
    return B      # B == 128: single tile


def meta_scaling(year_emb, genres_emb, title_emb, w1, b1, w2, b2, *, block_b=None):
    """year/genres/title: (B, E); w1: (H, 3E); b1: (H,); w2: (E, H); b2: (E,).

    Weights are in native PyTorch nn.Linear (out_features, in_features) layout.
    Returns (B, E), matching the PyTorch module.
    """
    B, E = year_emb.shape
    H = w1.shape[0]
    assert w1.shape == (H, 3 * E) and w2.shape == (E, H)
    assert genres_emb.shape == (B, E) and title_emb.shape == (B, E)

    if block_b is None:
        block_b = _pick_block_b(B)
    assert B % block_b == 0

    # Layout plumbing in the wrapper (fused by XLA): one lane-dense (3E, B) slab.
    x_t = jnp.concatenate([year_emb, genres_emb, title_emb], axis=1).T  # (3E, B)
    b1_2d = b1.reshape(H, 1)
    b2_2d = b2.reshape(E, 1)

    dtype_bytes = jnp.dtype(year_emb.dtype).itemsize
    cost = pl.CostEstimate(
        flops=2 * B * (3 * E * H + H * E),
        transcendentals=0,
        bytes_accessed=(3 * E * B + E * B) * dtype_bytes
        + (3 * E * H + H + H * E + E) * dtype_bytes,
    )

    grid = (B // block_b,)
    out_t = pl.pallas_call(
        meta_scaling_kernel,
        out_shape=jax.ShapeDtypeStruct((E, B), year_emb.dtype),
        grid_spec=pltpu.PrefetchScalarGridSpec(
            num_scalar_prefetch=0,
            grid=grid,
            in_specs=[
                pl.BlockSpec((3 * E, block_b), lambda i: (0, i)),  # X^T tile
                pl.BlockSpec((H, 3 * E), lambda i: (0, 0)),        # W1 (resident)
                pl.BlockSpec((H, 1), lambda i: (0, 0)),            # b1
                pl.BlockSpec((E, H), lambda i: (0, 0)),            # W2 (resident)
                pl.BlockSpec((E, 1), lambda i: (0, 0)),            # b2
            ],
            out_specs=pl.BlockSpec((E, block_b), lambda i: (0, i)),
        ),
        compiler_params=pltpu.CompilerParams(
            dimension_semantics=("parallel",)),
        cost_estimate=cost,
    )(x_t, w1, b1_2d, w2, b2_2d)

    return out_t.T  # (B, E), module semantics


def meta_scaling_ref(year_emb, genres_emb, title_emb, w1, b1, w2, b2):
    """Pure-JAX reference mirroring the PyTorch module (weights in (out, in) layout)."""
    x = jnp.concatenate([year_emb, genres_emb, title_emb], axis=1)
    h = jnp.maximum(x @ w1.T + b1, 0.0)
    return h @ w2.T + b2


if __name__ == "__main__":
    # Small shapes consistent with the module: args.embedding_size = 32, hidden = 16.
    B = 256        # batch (lane axis inside the kernel; 2 grid steps at block_b=128)
    E = 32         # embedding_size
    H = 16         # hidden width of the first Linear

    key = jax.random.PRNGKey(0)
    k_year, k_gen, k_title, k_w1, k_b1, k_w2, k_b2 = jax.random.split(key, 7)

    # Simulated rec_model.get_embs(x)[5:8] item-side embeddings.
    year_emb   = jax.random.normal(k_year,  (B, E), dtype=jnp.float32)
    genres_emb = jax.random.normal(k_gen,   (B, E), dtype=jnp.float32)
    title_emb  = jax.random.normal(k_title, (B, E), dtype=jnp.float32)

    # Parameters in native PyTorch nn.Linear (out_features, in_features) layout.
    lim1 = 1.0 / jnp.sqrt(3.0 * E)
    lim2 = 1.0 / jnp.sqrt(float(H))
    w1 = jax.random.uniform(k_w1, (H, 3 * E), jnp.float32, -lim1, lim1)
    b1 = jax.random.uniform(k_b1, (H,),       jnp.float32, -lim1, lim1)
    w2 = jax.random.uniform(k_w2, (E, H),     jnp.float32, -lim2, lim2)
    b2 = jax.random.uniform(k_b2, (E,),       jnp.float32, -lim2, lim2)

    out = meta_scaling(year_emb, genres_emb, title_emb, w1, b1, w2, b2)
    out = jax.block_until_ready(out)

    ref = meta_scaling_ref(year_emb, genres_emb, title_emb, w1, b1, w2, b2)
    assert out.shape == (B, E)
    assert jnp.allclose(out, ref, atol=1e-5, rtol=1e-5)

    # TODO(synk): rec_model.get_embs(x) (embedding-table gather) is external to
    # this module and is simulated via precomputed embedding inputs.
    print("KERNEL_OK")
</pallas_src>

<mosaic_0001>
module attributes {stable_mosaic.version = 11 : i64} {
  func.func @meta_scaling_kernel(%arg0: i32, %arg1: memref<96x128xf32, #tpu.memory_space<vmem>>, %arg2: memref<16x96xf32, #tpu.memory_space<vmem>>, %arg3: memref<16x1xf32, #tpu.memory_space<vmem>>, %arg4: memref<32x16xf32, #tpu.memory_space<vmem>>, %arg5: memref<32x1xf32, #tpu.memory_space<vmem>>, %arg6: memref<32x128xf32, #tpu.memory_space<vmem>>) attributes {dimension_semantics = [#tpu.dimension_semantics<parallel>], iteration_bounds = array<i64: 2>, scalar_prefetch = 0 : i64, scratch_operands = 0 : i64, tpu.core_type = #tpu.core_type<tc>, window_params = [{transform_indices = @transform_0, window_bounds = array<i64: 96, 128>}, {pipeline_mode = #tpu.pipeline_mode<synchronous>, transform_indices = @transform_1, window_bounds = array<i64: 16, 96>}, {pipeline_mode = #tpu.pipeline_mode<synchronous>, transform_indices = @transform_2, window_bounds = array<i64: 16, 1>}, {pipeline_mode = #tpu.pipeline_mode<synchronous>, transform_indices = @transform_3, window_bounds = array<i64: 32, 16>}, {pipeline_mode = #tpu.pipeline_mode<synchronous>, transform_indices = @transform_4, window_bounds = array<i64: 32, 1>}, {transform_indices = @transform_5, window_bounds = array<i64: 32, 128>}]} {
    %c0 = arith.constant 0 : index
    %c0_0 = arith.constant 0 : index
    %0 = vector.load %arg2[%c0, %c0_0] : memref<16x96xf32, #tpu.memory_space<vmem>>, vector<16x96xf32>
    %c0_1 = arith.constant 0 : index
    %c0_2 = arith.constant 0 : index
    %1 = vector.load %arg1[%c0_1, %c0_2] : memref<96x128xf32, #tpu.memory_space<vmem>>, vector<96x128xf32>
    %cst = arith.constant dense<0.000000e+00> : vector<16x128xf32>
    %2 = tpu.matmul %0, %1, %cst {dimension_numbers = #tpu.dot_dimension_numbers<[1], [0], [0], [1], [0, 0, 1, 1], [], []>} : vector<16x96xf32>, vector<96x128xf32>, vector<16x128xf32> -> vector<16x128xf32>
    %c0_3 = arith.constant 0 : index
    %c0_4 = arith.constant 0 : index
    %3 = vector.load %arg3[%c0_3, %c0_4] : memref<16x1xf32, #tpu.memory_space<vmem>>, vector<16x1xf32>
    %4 = vector.broadcast %3 : vector<16x1xf32> to vector<16x128xf32>
    %5 = arith.addf %2, %4 : vector<16x128xf32>
    %cst_5 = arith.constant 0.000000e+00 : f32
    %6 = vector.broadcast %cst_5 : f32 to vector<16x128xf32>
    %7 = arith.maximumf %5, %6 : vector<16x128xf32>
    %c0_6 = arith.constant 0 : index
    %c0_7 = arith.constant 0 : index
    %8 = vector.load %arg4[%c0_6, %c0_7] : memref<32x16xf32, #tpu.memory_space<vmem>>, vector<32x16xf32>
    %cst_8 = arith.constant dense<0.000000e+00> : vector<32x128xf32>
    %9 = tpu.matmul %8, %7, %cst_8 {dimension_numbers = #tpu.dot_dimension_numbers<[1], [0], [0], [1], [0, 0, 1, 1], [], []>} : vector<32x16xf32>, vector<16x128xf32>, vector<32x128xf32> -> vector<32x128xf32>
    %c0_9 = arith.constant 0 : index
    %c0_10 = arith.constant 0 : index
    %10 = vector.load %arg5[%c0_9, %c0_10] : memref<32x1xf32, #tpu.memory_space<vmem>>, vector<32x1xf32>
    %11 = vector.broadcast %10 : vector<32x1xf32> to vector<32x128xf32>
    %12 = arith.addf %9, %11 : vector<32x128xf32>
    %c0_11 = arith.constant 0 : index
    %c0_12 = arith.constant 0 : index
    %13 = vector.load %arg6[%c0_11, %c0_12] : memref<32x128xf32, #tpu.memory_space<vmem>>, vector<32x128xf32>
    tpu.vector_store %arg6[%c0_11, %c0_12], %12 {strides = array<i32>} : memref<32x128xf32, #tpu.memory_space<vmem>>, vector<32x128xf32>,
    return
  }
  func.func @transform_0(%arg0: i32) -> (i32, i32) {
    %c0_i32 = arith.constant 0 : i32
    %c0_i32_0 = arith.constant 0 : i32
    return %c0_i32, %arg0 : i32, i32
  }
  func.func @transform_1(%arg0: i32) -> (i32, i32) {
    %c0_i32 = arith.constant 0 : i32
    %c0_i32_0 = arith.constant 0 : i32
    %c0_i32_1 = arith.constant 0 : i32
    return %c0_i32, %c0_i32_0 : i32, i32
  }
  func.func @transform_2(%arg0: i32) -> (i32, i32) {
    %c0_i32 = arith.constant 0 : i32
    %c0_i32_0 = arith.constant 0 : i32
    %c0_i32_1 = arith.constant 0 : i32
    return %c0_i32, %c0_i32_0 : i32, i32
  }
  func.func @transform_3(%arg0: i32) -> (i32, i32) {
    %c0_i32 = arith.constant 0 : i32
    %c0_i32_0 = arith.constant 0 : i32
    %c0_i32_1 = arith.constant 0 : i32
    return %c0_i32, %c0_i32_0 : i32, i32
  }
  func.func @transform_4(%arg0: i32) -> (i32, i32) {
    %c0_i32 = arith.constant 0 : i32
    %c0_i32_0 = arith.constant 0 : i32
    %c0_i32_1 = arith.constant 0 : i32
    return %c0_i32, %c0_i32_0 : i32, i32
  }
  func.func @transform_5(%arg0: i32) -> (i32, i32) {
    %c0_i32 = arith.constant 0 : i32
    %c0_i32_0 = arith.constant 0 : i32
    return %c0_i32, %arg0 : i32, i32
  }
}

</mosaic_0001>

<llo_original>
// kernel: tpu_custom_call.1
$region0: #{tpu_custom_call.1}
  #allocation0 [shape = 'u32[]', space=smem, size = 0x4, offset = 0x4, fixed_abs, tag = 'smem constant byte address 0x4 - core index']
  #allocation1 [shape = 'u32[144,128]{1,0:T(1,128)}', space=vmem, size = 0x12000, scoped, tag = 'internal scratch']
  %s0 = inlined_call_operand.hbm [shape: f32[96,256], index: 0, kind: input, shape index: {}]
  %s1 = inlined_call_operand.vmem [shape: f32[16,96], index: 1, kind: input, shape index: {}]
  %s2 = inlined_call_operand.vmem [shape: f32[16,1], index: 2, kind: input, shape index: {}]
  %s3 = inlined_call_operand.vmem [shape: f32[32,16], index: 3, kind: input, shape index: {}]
  %s4 = inlined_call_operand.vmem [shape: f32[32,1], index: 4, kind: input, shape index: {}]
  %s5 = inlined_call_operand.hbm [shape: f32[32,256], index: 5, kind: output, shape index: {}]
  %s6 = sld [smem:[#allocation0]]
  $region57: #{tpu_custom_call.1} parent=0
    _
  %s8 = ssub.s32 1, %s6
  %s9 = scalar_select 0, %s8, %s6
  $region1: #{tpu_custom_call.1} parent=0
    #allocation2 [shape = 'u8[98304]{0}', space=vmem, size = 0x18000, scoped, tag = 'input window, operand 0']
    #allocation3 [shape = 's32[2]{0}', space=sflag, size = 0x8, scoped, tag = 'scoped memory for tpu_custom_call.1']
    #allocation4 [shape = 's32[2]{0}', space=sflag, size = 0x8, scoped, tag = 'scoped memory for tpu_custom_call.1']
    #allocation5 [shape = 'u8[32768]{0}', space=vmem, size = 0x8000, scoped, tag = 'output window, operand 0']
    %10 = vsyncpa [#allocation3], 0
    %s11 = scalar_lea.sflag [#allocation3], 1
    %12 = vsyncpa %s11, 0
    %13 = vsyncpa [#allocation4], 0
    %s14 = scalar_lea.sflag [#allocation4], 1
    %15 = vsyncpa %s14, 0
    loop: start=0, step=1, limit=4
    $region2: #{tpu_custom_call.1} parent=1 // loop_pre_header
      _
    $region3: #{tpu_custom_call.1} parent=1 // loop_header
      %s17 = sphi 0, %s21
      %p18 = scmp.ge.s32.totalorder %s17, 4
      %s27 = sphi 0, %s29
      %s30 = sphi 0, %s27
      %s31 = sphi 0, %s30
      %s47 = sphi 0, %s31
      %s51 = sphi 0, %s51
      %s53 = sphi 0, %s51
      %s54 = sphi 0, %s53
      %s68 = sphi 0, %s54
      %s72 = sphi 0, %s72
      %s74 = sphi 0, %s72
      %s75 = sphi 0, %s74
      %s89 = sphi 0, %s75
      %s93 = sphi 0, %s93
      %s95 = sphi 0, %s93
      %s96 = sphi 0, %s95
      %s110 = sphi 0, %s96
      %s114 = sphi 0, %s114
      %s116 = sphi 0, %s114
      %s117 = sphi 0, %s116
      %s131 = sphi 0, %s117
      %s137 = sphi 0, %s139
      %s140 = sphi 0, %s137
      %s141 = sphi 0, %s140
      %s157 = sphi 0, %s141
    $region4: #{tpu_custom_call.1} parent=1 // loop_header_branch
      %20 = sbr.rel (%p18) target = $region8
    $region5: #{tpu_custom_call.1} parent=1 // loop_body
      %s22 = ssub.s32 %s17, 1
      %s23 = ssub.s32 %s17, 2
      %s24 = sadd.s32 %s17, 1
      %s25 = ssub.s32 %s17, %s24
      %p26 = scmp.eq.s32.totalorder %s25, 0
      %s28 = sadd.s32 %s27, 1
      %s29 = scalar_select %p26, %s27, %s28
      %p32 = pneg %p26
      %p33 = scmp.eq.s32.totalorder %s17, 1
      %p34 = por %p32, %p33
      %p35 = scmp.ne.s32.totalorder %s27, %s30
      %p36 = scmp.eq.s32.totalorder %s17, 0
      %p37 = por %p35, %p36
      %p38 = scmp.ne.s32.totalorder %s27, %s30
      %p39 = scmp.eq.s32.totalorder %s22, 1
      %p40 = por %p38, %p39
      %p41 = scmp.ne.s32.totalorder %s30, %s31
      %p42 = scmp.eq.s32.totalorder %s22, 0
      %p43 = por %p41, %p42
      %p44 = scmp.ne.s32.totalorder %s30, %s31
      %p45 = scmp.eq.s32.totalorder %s23, 1
      %p46 = por %p44, %p45
      %p48 = scmp.ne.s32.totalorder %s31, %s47
      %p49 = scmp.eq.s32.totalorder %s23, 0
      %p50 = por %p48, %p49
      %s52 = sadd.s32 %s51, 1
      %p55 = scmp.eq.s32.totalorder %s17, 1
      %p56 = scmp.ne.s32.totalorder %s51, %s53
      %p57 = scmp.eq.s32.totalorder %s17, 0
      %p58 = por %p56, %p57
      %p59 = scmp.ne.s32.totalorder %s51, %s53
      %p60 = scmp.eq.s32.totalorder %s22, 1
      %p61 = por %p59, %p60
      %p62 = scmp.ne.s32.totalorder %s53, %s54
      %p63 = scmp.eq.s32.totalorder %s22, 0
      %p64 = por %p62, %p63
      %p65 = scmp.ne.s32.totalorder %s53, %s54
      %p66 = scmp.eq.s32.totalorder %s23, 1
      %p67 = por %p65, %p66
      %p69 = scmp.ne.s32.totalorder %s54, %s68
      %p70 = scmp.eq.s32.totalorder %s23, 0
      %p71 = por %p69, %p70
      %s73 = sadd.s32 %s72, 1
      %p76 = scmp.eq.s32.totalorder %s17, 1
      %p77 = scmp.ne.s32.totalorder %s72, %s74
      %p78 = scmp.eq.s32.totalorder %s17, 0
      %p79 = por %p77, %p78
      %p80 = scmp.ne.s32.totalorder %s72, %s74
      %p81 = scmp.eq.s32.totalorder %s22, 1
      %p82 = por %p80, %p81
      %p83 = scmp.ne.s32.totalorder %s74, %s75
      %p84 = scmp.eq.s32.totalorder %s22, 0
      %p85 = por %p83, %p84
      %p86 = scmp.ne.s32.totalorder %s74, %s75
      %p87 = scmp.eq.s32.totalorder %s23, 1
      %p88 = por %p86, %p87
      %p90 = scmp.ne.s32.totalorder %s75, %s89
      %p91 = scmp.eq.s32.totalorder %s23, 0
      %p92 = por %p90, %p91
      %s94 = sadd.s32 %s93, 1
      %p97 = scmp.eq.s32.totalorder %s17, 1
      %p98 = scmp.ne.s32.totalorder %s93, %s95
      %p99 = scmp.eq.s32.totalorder %s17, 0
      %p100 = por %p98, %p99
      %p101 = scmp.ne.s32.totalorder %s93, %s95
      %p102 = scmp.eq.s32.totalorder %s22, 1
      %p103 = por %p101, %p102
      %p104 = scmp.ne.s32.totalorder %s95, %s96
      %p105 = scmp.eq.s32.totalorder %s22, 0
      %p106 = por %p104, %p105
      %p107 = scmp.ne.s32.totalorder %s95, %s96
      %p108 = scmp.eq.s32.totalorder %s23, 1
      %p109 = por %p107, %p108
      %p111 = scmp.ne.s32.totalorder %s96, %s110
      %p112 = scmp.eq.s32.totalorder %s23, 0
      %p113 = por %p111, %p112
      %s115 = sadd.s32 %s114, 1
      %p118 = scmp.eq.s32.totalorder %s17, 1
      %p119 = scmp.ne.s32.totalorder %s114, %s116
      %p120 = scmp.eq.s32.totalorder %s17, 0
      %p121 = por %p119, %p120
      %p122 = scmp.ne.s32.totalorder %s114, %s116
      %p123 = scmp.eq.s32.totalorder %s22, 1
      %p124 = por %p122, %p123
      %p125 = scmp.ne.s32.totalorder %s116, %s117
      %p126 = scmp.eq.s32.totalorder %s22, 0
      %p127 = por %p125, %p126
      %p128 = scmp.ne.s32.totalorder %s116, %s117
      %p129 = scmp.eq.s32.totalorder %s23, 1
      %p130 = por %p128, %p129
      %p132 = scmp.ne.s32.totalorder %s117, %s131
      %p133 = scmp.eq.s32.totalorder %s23, 0
      %p134 = por %p132, %p133
      %s135 = ssub.s32 %s17, %s24
      %p136 = scmp.eq.s32.totalorder %s135, 0
      %s138 = sadd.s32 %s137, 1
      %s139 = scalar_select %p136, %s137, %s138
      %p142 = pneg %p136
      %p143 = scmp.eq.s32.totalorder %s17, 1
      %p144 = por %p142, %p143
      %p145 = scmp.ne.s32.totalorder %s137, %s140
      %p146 = scmp.eq.s32.totalorder %s17, 0
      %p147 = por %p145, %p146
      %p148 = scmp.ne.s32.totalorder %s137, %s140
      %p149 = scmp.eq.s32.totalorder %s22, 1
      %p150 = por %p148, %p149
      %p151 = scmp.ne.s32.totalorder %s140, %s141
      %p152 = scmp.eq.s32.totalorder %s22, 0
      %p153 = por %p151, %p152
      %p154 = scmp.ne.s32.totalorder %s140, %s141
      %p155 = scmp.eq.s32.totalorder %s23, 1
      %p156 = por %p154, %p155
      %p158 = scmp.ne.s32.totalorder %s141, %s157
      %p159 = scmp.eq.s32.totalorder %s23, 0
      %p160 = por %p158, %p159
      %p161 = scmp.le.s32.totalorder 1, %s17
      %p162 = scmp.lt.s32.totalorder %s17, 3
      %p163 = pnand %p161, %p162
      %p164 = pneg %p163
      // Predicated region
      $region9: #{tpu_custom_call.1} parent=5 // pred_check
        _
      $region10: #{tpu_custom_call.1} parent=5 // pred_check_branch
        %166 = sbr.rel (%p163) target = $region12
      $region11: #{tpu_custom_call.1} parent=5 // pred_region
        %s167 = ssub.s32 %s17, 1
        // Predicated region
        $region13: #{tpu_custom_call.1} parent=11 // pred_check
          %p168 = pneg %p64
        $region14: #{tpu_custom_call.1} parent=11 // pred_check_branch
          %170 = sbr.rel (%p168) target = $region16
        $region15: #{tpu_custom_call.1} parent=11 // pred_region
          _
        $region16: #{tpu_custom_call.1} parent=11 // pred_fallthru
          _
        // Predicated region
        $region17: #{tpu_custom_call.1} parent=11 // pred_check
          %p171 = pneg %p85
        $region18: #{tpu_custom_call.1} parent=11 // pred_check_branch
          %173 = sbr.rel (%p171) target = $region20
        $region19: #{tpu_custom_call.1} parent=11 // pred_region
          _
        $region20: #{tpu_custom_call.1} parent=11 // pred_fallthru
          _
        // Predicated region
        $region21: #{tpu_custom_call.1} parent=11 // pred_check
          %p174 = pneg %p106
        $region22: #{tpu_custom_call.1} parent=11 // pred_check_branch
          %176 = sbr.rel (%p174) target = $region24
        $region23: #{tpu_custom_call.1} parent=11 // pred_region
          _
        $region24: #{tpu_custom_call.1} parent=11 // pred_fallthru
          _
        // Predicated region
        $region25: #{tpu_custom_call.1} parent=11 // pred_check
          %p177 = pneg %p127
        $region26: #{tpu_custom_call.1} parent=11 // pred_check_branch
          %179 = sbr.rel (%p177) target = $region28
        $region27: #{tpu_custom_call.1} parent=11 // pred_region
          _
        $region28: #{tpu_custom_call.1} parent=11 // pred_fallthru
          _
      $region12: #{tpu_custom_call.1} parent=5 // pred_fallthru
        _
      %p180 = scmp.lt.s32.totalorder %s17, 2
      // Predicated region
      $region29: #{tpu_custom_call.1} parent=5 // pred_check
        %p181 = pneg %p180
      $region30: #{tpu_custom_call.1} parent=5 // pred_check_branch
        %183 = sbr.rel (%p181) target = $region32
      $region31: #{tpu_custom_call.1} parent=5 // pred_region
        // Predicated region
        $region33: #{tpu_custom_call.1} parent=31 // pred_check
          %p184 = pneg %p37
        $region34: #{tpu_custom_call.1} parent=31 // pred_check_branch
          %186 = sbr.rel (%p184) target = $region36
        $region35: #{tpu_custom_call.1} parent=31 // pred_region
          %s187 = sand.u32 %s27, 1
          %s188 = scalar_lea.sflag [#allocation3], %s187
          %s189 = sand.u32 %s27, 1
          %s190 = smul.addr %s189, 96
          %s191 = scalar_lea.vmem [#allocation2], %s190
          %s193 = ssub.s32 1536, 1536
          %194 = vsyncadd %s188, %s193
          %s195 = smul.addr %s17, 128
          %s196 = scalar_lea.hbm %s0, %s195
          %s197 = sshll.u32 %s191, 4
          %s198 = int_to_ptr.vmem [resolvable:$true] %s197
          %203 = dma.hbm_to_vmem [thread:$0]  %s196, 1536, %s198, %s188, 256, 128, 8
        $region36: #{tpu_custom_call.1} parent=31 // pred_fallthru
          _
      $region32: #{tpu_custom_call.1} parent=5 // pred_fallthru
        _
      %p204 = scmp.le.s32.totalorder 1, %s17
      %p205 = scmp.lt.s32.totalorder %s17, 3
      %p206 = pnand %p204, %p205
      %p207 = pneg %p206
      // Predicated region
      $region37: #{tpu_custom_call.1} parent=5 // pred_check
        _
      $region38: #{tpu_custom_call.1} parent=5 // pred_check_branch
        %209 = sbr.rel (%p206) target = $region40
      $region39: #{tpu_custom_call.1} parent=5 // pred_region
        %s210 = ssub.s32 %s17, 1
        %s211 = sand.u32 %s30, 1
        %s212 = scalar_lea.sflag [#allocation3], %s211
        %s213 = sand.u32 %s30, 1
        %s214 = smul.addr %s213, 96
        %s215 = scalar_lea.vmem [#allocation2], %s214
        // Predicated region
        $region41: #{tpu_custom_call.1} parent=39 // pred_check
          %p216 = pneg %p43
        $region42: #{tpu_custom_call.1} parent=39 // pred_check_branch
          %218 = sbr.rel (%p216) target = $region44
        $region43: #{tpu_custom_call.1} parent=39 // pred_region
          %219 = dma.done %s212, 1536
        $region44: #{tpu_custom_call.1} parent=39 // pred_fallthru
          _
        %s220 = sand.u32 %s30, 1
        %s221 = scalar_lea.sflag [#allocation3], %s220
        %s222 = sand.u32 %s30, 1
        %s223 = smul.addr %s222, 96
        %s224 = scalar_lea.vmem [#allocation2], %s223
        %p225 = pneg %p43
        %p226 = pneg %p40
        %p227 = pneg %p64
        %p228 = pneg %p61
        %p229 = pneg %p85
        %p230 = pneg %p82
        %p231 = pneg %p106
        %p232 = pneg %p103
        %p233 = pneg %p127
        %p234 = pneg %p124
        %p235 = pneg %p153
        %p236 = pneg %p150
        %s237 = sand.u32 %s140, 1
        %s238 = scalar_lea.sflag [#allocation4], %s237
        %s239 = sand.u32 %s140, 1
        %s240 = smul.addr %s239, 32
        %s241 = scalar_lea.vmem [#allocation5], %s240
        %v242 = vld [vmem:[%s1] sm:$0xff]
        %v243 = vld [vmem:[%s1 + $0x8] sm:$0xff]
        %v244 = vld [vmem:[%s215] sm:$0xff]
        %v245 = vld [vmem:[%s215 + $0x8] sm:$0xff]
        %v246 = vld [vmem:[%s215 + $0x10] sm:$0xff]
        %v247 = vld [vmem:[%s215 + $0x18] sm:$0xff]
        %v248 = vld [vmem:[%s215 + $0x20] sm:$0xff]
        %v249 = vld [vmem:[%s215 + $0x28] sm:$0xff]
        %v250 = vld [vmem:[%s215 + $0x30] sm:$0xff]
        %v251 = vld [vmem:[%s215 + $0x38] sm:$0xff]
        %v252 = vld [vmem:[%s215 + $0x40] sm:$0xff]
        %v253 = vld [vmem:[%s215 + $0x48] sm:$0xff]
        %v254 = vld [vmem:[%s215 + $0x50] sm:$0xff]
        %v255 = vld [vmem:[%s215 + $0x58] sm:$0xff]
        %v256 = vld [vmem:[%s2] sm:$0xff]
        %v257 = vld [vmem:[%s2 + $0x8] sm:$0xff]
        %259 = vset.pattern.permute.xlu0 0
        %260 = vperm.xlu0 %259, %v256
        %v261 = vpop.permute.xlu0 %260
        %264 = vset.pattern.permute.xlu0 0
        %265 = vperm.xlu0 %264, %v257
        %v266 = vpop.permute.xlu0 %265
        %vm268 = vcmask 785408
        %v270 = vsel %vm268, %v242, 0
        %v273 = vsel %vm268, %v243, 0
        %275 = vmatprep.subr.mxu0 0.0
        %276 = vmatpush1.msra.mxu0 0.0
        %277 = vmatprep.subr.mxu0 0.0
        %278 = vmatpush1.msra.mxu0 0.0
        %279 = vmatprep.subr.mxu0 0.0
        %280 = vmatpush1.msra.mxu0 0.0
        %281 = vmatprep.subr.mxu0 0.0
        %282 = vmatpush1.msra.mxu0 0.0
        %283 = vmatprep.subr.mxu0 0.0
        %284 = vmatpush1.msra.mxu0 %v255
        %285 = vmatprep.subr.mxu0 0.0
        %286 = vmatpush1.msra.mxu0 %v254
        %287 = vmatprep.subr.mxu0 0.0
        %288 = vmatpush1.msra.mxu0 %v253
        %289 = vmatprep.subr.mxu0 0.0
        %290 = vmatpush1.msra.mxu0 %v252
        %291 = vmatprep.subr.mxu0 0.0
        %292 = vmatpush1.msra.mxu0 %v251
        %293 = vmatprep.subr.mxu0 0.0
        %294 = vmatpush1.msra.mxu0 %v250
        %295 = vmatprep.subr.mxu0 0.0
        %296 = vmatpush1.msra.mxu0 %v249
        %297 = vmatprep.subr.mxu0 0.0
        %298 = vmatpush1.msra.mxu0 %v248
        %299 = vmatprep.subr.mxu0 0.0
        %300 = vmatpush1.msra.mxu0 %v247
        %301 = vmatprep.subr.mxu0 0.0
        %302 = vmatpush1.msra.mxu0 %v246
        %303 = vmatprep.subr.mxu0 0.0
        %304 = vmatpush1.msra.mxu0 %v245
        %305 = vmatprep.subr.mxu0 0.0
        %306 = vmatpush1.msra.mxu0 %v244
        %307 = vmatprep.subr.mxu0 0.0
        %308 = vmatpush2.msra.mxu0 0.0
        %309 = vmatprep.subr.mxu0 0.0
        %310 = vmatpush2.msra.mxu0 0.0
        %311 = vmatprep.subr.mxu0 0.0
        %312 = vmatpush2.msra.mxu0 0.0
        %313 = vmatprep.subr.mxu0 0.0
        %314 = vmatpush2.msra.mxu0 0.0
        %315 = vmatprep.subr.mxu0 0.0
        %316 = vmatpush2.msra.mxu0 0.0
        %317 = vmatprep.subr.mxu0 0.0
        %318 = vmatpush2.msra.mxu0 0.0
        %319 = vmatprep.subr.mxu0 0.0
        %320 = vmatpush2.msra.mxu0 0.0
        %321 = vmatprep.subr.mxu0 0.0
        %322 = vmatpush2.msra.mxu0 0.0
        %323 = vmatprep.subr.mxu0 0.0
        %324 = vmatpush2.msra.mxu0 0.0
        %325 = vmatprep.subr.mxu0 0.0
        %326 = vmatpush2.msra.mxu0 0.0
        %327 = vmatprep.subr.mxu0 0.0
        %328 = vmatpush2.msra.mxu0 0.0
        %329 = vmatprep.subr.mxu0 0.0
        %330 = vmatpush2.msra.mxu0 0.0
        %331 = vmatprep.subr.mxu0 0.0
        %332 = vmatpush2.msra.mxu0 0.0
        %333 = vmatprep.subr.mxu0 0.0
        %334 = vmatpush2.msra.mxu0 0.0
        %335 = vmatprep.subr.mxu0 0.0
        %336 = vmatpush2.msra.mxu0 0.0
        %337 = vmatprep.subr.mxu0 0.0
        %338 = vmatpush2.msra.mxu0 0.0
        %339 = vmatprep.mubr.f32.mxu0 0.0
        %340 = vmatmul.mubr.f32.gmra.mxu0 %v270
        %v341 = vpop.f32.mrf.mxu0
        %v342 = vadd.f32 %v261, %v341
        %v343 = vpop.f32.mrf.mxu0
        %344 = vmatprep.mubr.f32.mxu0 0.0
        %345 = vmatmul.mubr.f32.gmra.mxu0 %v273
        %v346 = vpop.f32.mrf.mxu0
        %v347 = vadd.f32 %v266, %v346
        %v348 = vpop.f32.mrf.mxu0
        %349 = vdwg.mxu0
        %v350 = vmax.f32 %v342, 0.0
        %v351 = vmax.f32 %v347, 0.0
        %v352 = vld [vmem:[%s3] sm:$0xff]
        %v353 = vld [vmem:[%s3 + $0x8] sm:$0xff]
        %v354 = vld [vmem:[%s3 + $0x10] sm:$0xff]
        %v355 = vld [vmem:[%s3 + $0x18] sm:$0xff]
        %v356 = vld [vmem:[%s4] sm:$0xff]
        %v357 = vld [vmem:[%s4 + $0x8] sm:$0xff]
        %v358 = vld [vmem:[%s4 + $0x10] sm:$0xff]
        %v359 = vld [vmem:[%s4 + $0x18] sm:$0xff]
        %361 = vset.pattern.permute.xlu0 0
        %362 = vperm.xlu0 %361, %v356
        %v363 = vpop.permute.xlu0 %362
        %366 = vset.pattern.permute.xlu0 0
        %367 = vperm.xlu0 %366, %v357
        %v368 = vpop.permute.xlu0 %367
        %371 = vset.pattern.permute.xlu0 0
        %372 = vperm.xlu0 %371, %v358
        %v373 = vpop.permute.xlu0 %372
        %376 = vset.pattern.permute.xlu0 0
        %377 = vperm.xlu0 %376, %v359
        %v378 = vpop.permute.xlu0 %377
        %vm380 = vcmask 130048
        %v382 = vsel %vm380, %v352, 0
        %v385 = vsel %vm380, %v353, 0
        %v388 = vsel %vm380, %v354, 0
        %v391 = vsel %vm380, %v355, 0
        %393 = vmatprep.subr.mxu0 0.0
        %394 = vmatpush1.msra.mxu0 0.0
        %395 = vmatprep.subr.mxu0 0.0
        %396 = vmatpush1.msra.mxu0 0.0
        %397 = vmatprep.subr.mxu0 0.0
        %398 = vmatpush1.msra.mxu0 0.0
        %399 = vmatprep.subr.mxu0 0.0
        %400 = vmatpush1.msra.mxu0 0.0
        %401 = vmatprep.subr.mxu0 0.0
        %402 = vmatpush1.msra.mxu0 0.0
        %403 = vmatprep.subr.mxu0 0.0
        %404 = vmatpush1.msra.mxu0 0.0
        %405 = vmatprep.subr.mxu0 0.0
        %406 = vmatpush1.msra.mxu0 0.0
        %407 = vmatprep.subr.mxu0 0.0
        %408 = vmatpush1.msra.mxu0 0.0
        %409 = vmatprep.subr.mxu0 0.0
        %410 = vmatpush1.msra.mxu0 0.0
        %411 = vmatprep.subr.mxu0 0.0
        %412 = vmatpush1.msra.mxu0 0.0
        %413 = vmatprep.subr.mxu0 0.0
        %414 = vmatpush1.msra.mxu0 0.0
        %415 = vmatprep.subr.mxu0 0.0
        %416 = vmatpush1.msra.mxu0 0.0
        %417 = vmatprep.subr.mxu0 0.0
        %418 = vmatpush1.msra.mxu0 0.0
        %419 = vmatprep.subr.mxu0 0.0
        %420 = vmatpush1.msra.mxu0 0.0
        %421 = vmatprep.subr.mxu0 0.0
        %422 = vmatpush1.msra.mxu0 %v351
        %423 = vmatprep.subr.mxu0 0.0
        %424 = vmatpush1.msra.mxu0 %v350
        %425 = vmatprep.subr.mxu0 0.0
        %426 = vmatpush2.msra.mxu0 0.0
        %427 = vmatprep.subr.mxu0 0.0
        %428 = vmatpush2.msra.mxu0 0.0
        %429 = vmatprep.subr.mxu0 0.0
        %430 = vmatpush2.msra.mxu0 0.0
        %431 = vmatprep.subr.mxu0 0.0
        %432 = vmatpush2.msra.mxu0 0.0
        %433 = vmatprep.subr.mxu0 0.0
        %434 = vmatpush2.msra.mxu0 0.0
        %435 = vmatprep.subr.mxu0 0.0
        %436 = vmatpush2.msra.mxu0 0.0
        %437 = vmatprep.subr.mxu0 0.0
        %438 = vmatpush2.msra.mxu0 0.0
        %439 = vmatprep.subr.mxu0 0.0
        %440 = vmatpush2.msra.mxu0 0.0
        %441 = vmatprep.subr.mxu0 0.0
        %442 = vmatpush2.msra.mxu0 0.0
        %443 = vmatprep.subr.mxu0 0.0
        %444 = vmatpush2.msra.mxu0 0.0
        %445 = vmatprep.subr.mxu0 0.0
        %446 = vmatpush2.msra.mxu0 0.0
        %447 = vmatprep.subr.mxu0 0.0
        %448 = vmatpush2.msra.mxu0 0.0
        %449 = vmatprep.subr.mxu0 0.0
        %450 = vmatpush2.msra.mxu0 0.0
        %451 = vmatprep.subr.mxu0 0.0
        %452 = vmatpush2.msra.mxu0 0.0
        %453 = vmatprep.subr.mxu0 0.0
        %454 = vmatpush2.msra.mxu0 0.0
        %455 = vmatprep.subr.mxu0 0.0
        %456 = vmatpush2.msra.mxu0 0.0
        %457 = vmatprep.mubr.f32.mxu0 0.0
        %458 = vmatmul.mubr.f32.gmra.mxu0 %v382
        %v459 = vpop.f32.mrf.mxu0
        %v460 = vadd.f32 %v363, %v459
        %v461 = vpop.f32.mrf.mxu0
        %462 = vmatprep.mubr.f32.mxu0 0.0
        %463 = vmatmul.mubr.f32.gmra.mxu0 %v385
        %v464 = vpop.f32.mrf.mxu0
        %v465 = vadd.f32 %v368, %v464
        %v466 = vpop.f32.mrf.mxu0
        %467 = vmatprep.mubr.f32.mxu0 0.0
        %468 = vmatmul.mubr.f32.gmra.mxu0 %v388
        %v469 = vpop.f32.mrf.mxu0
        %v470 = vadd.f32 %v373, %v469
        %v471 = vpop.f32.mrf.mxu0
        %472 = vmatprep.mubr.f32.mxu0 0.0
        %473 = vmatmul.mubr.f32.gmra.mxu0 %v391
        %v474 = vpop.f32.mrf.mxu0
        %v475 = vadd.f32 %v378, %v474
        %v476 = vpop.f32.mrf.mxu0
        %477 = vdwg.mxu0
        %478 = vst [vmem:[%s241] sm:$0xff] %v460
        %479 = vst [vmem:[%s241 + $0x8] sm:$0xff] %v465
        %480 = vst [vmem:[%s241 + $0x10] sm:$0xff] %v470
        %481 = vst [vmem:[%s241 + $0x18] sm:$0xff] %v475
        %s482 = sand.u32 %s140, 1
        %s483 = scalar_lea.sflag [#allocation4], %s482
        %s484 = sand.u32 %s140, 1
        %s485 = smul.addr %s484, 32
        %s486 = scalar_lea.vmem [#allocation5], %s485
        // Predicated region
        $region45: #{tpu_custom_call.1} parent=39 // pred_check
          %p487 = pneg %p150
        $region46: #{tpu_custom_call.1} parent=39 // pred_check_branch
          %489 = sbr.rel (%p487) target = $region48
        $region47: #{tpu_custom_call.1} parent=39 // pred_region
          %s491 = ssub.s32 512, 512
          %492 = vsyncadd %s483, %s491
          %s493 = smul.addr %s22, 128
          %s494 = scalar_lea.hbm %s5, %s493
          %s495 = sshll.u32 %s486, 4
          %s496 = int_to_ptr.vmem [resolvable:$true] %s495
          %501 = dma.vmem_to_hbm [thread:$0]  %s496, 512, %s494, %s483, 128, 256, 8
        $region48: #{tpu_custom_call.1} parent=39 // pred_fallthru
          _
      $region40: #{tpu_custom_call.1} parent=5 // pred_fallthru
        _
      %p502 = scmp.le.s32.totalorder 2, %s17
      // Predicated region
      $region49: #{tpu_custom_call.1} parent=5 // pred_check
        %p503 = pneg %p502
      $region50: #{tpu_custom_call.1} parent=5 // pred_check_branch
        %505 = sbr.rel (%p503) target = $region52
      $region51: #{tpu_custom_call.1} parent=5 // pred_region
        %s506 = ssub.s32 %s17, 2
        // Predicated region
        $region53: #{tpu_custom_call.1} parent=51 // pred_check
          %p507 = pneg %p156
        $region54: #{tpu_custom_call.1} parent=51 // pred_check_branch
          %509 = sbr.rel (%p507) target = $region56
        $region55: #{tpu_custom_call.1} parent=51 // pred_region
          %s510 = sand.u32 %s141, 1
          %s511 = scalar_lea.sflag [#allocation4], %s510
          %s512 = sand.u32 %s141, 1
          %s513 = smul.addr %s512, 32
          %s514 = scalar_lea.vmem [#allocation5], %s513
          %515 = dma.done %s511, 512
        $region56: #{tpu_custom_call.1} parent=51 // pred_fallthru
          _
      $region52: #{tpu_custom_call.1} parent=5 // pred_fallthru
        _
    $region6: #{tpu_custom_call.1} parent=1 // loop_footer
      %s21 = sadd.s32 1, %s17
    $region7: #{tpu_custom_call.1} parent=1 // loop_footer_branch
      %16 = sbr.rel target = $region3
    $region8: #{tpu_custom_call.1} parent=1 // loop_exit
      _
    %516 = vsyncpa [#allocation3], 1
    %s517 = scalar_lea.sflag [#allocation3], 1
    %518 = vsyncpa %s517, 1
    %519 = vsyncpa [#allocation4], 1
    %s520 = scalar_lea.sflag [#allocation4], 1
    %521 = vsyncpa %s520, 1

</llo_original>
